<compile_context>
chip_gen: v7x
topology: tpu7x:2x2x1
jax: 0.10.0
libtpu: 0.0.40
codegen_flags: <defaults>
</compile_context>

<pallas_src>
import functools

import jax
import jax.numpy as jnp
from jax.experimental import pallas as pl
from jax.experimental.pallas import tpu as pltpu


def _round_up(x, m):
    return (x + m - 1) // m * m


def _vq_kernel(x_ref, half_e2_ref, emb_ref, q_ref, partial_ref, *, n_valid, tile_n):
    # x_ref       : [tn, D]  current tile of flattened latents
    # half_e2_ref : [1, K]   0.5 * ||e||^2 (precomputed in the wrapper)
    # emb_ref     : [K, D]   full codebook
    # q_ref       : [tn, D]  quantized output tile
    # partial_ref : [8, D]   per-tile SSE partial (row 0 = column sums)
    x = x_ref[...].astype(jnp.float32)
    e = emb_ref[...].astype(jnp.float32)
    tn, d = x.shape
    k = e.shape[0]

    # x . e^T as a contraction over the last dim of both operands: the MXU
    # consumes `e` directly, no per-step [D, K] transpose through the XLU/VMEM.
    # TODO(synk): cast x/e to bf16 here (~4x MXU throughput on v5e, more on
    # v6e/v7x) once argmin stability vs the f32 reference is validated; the
    # tiny uniform(-1/K, 1/K) codebook makes near-ties plausible.
    xe = jax.lax.dot_general(
        x, e, dimension_numbers=(((1,), (1,)), ((), ())),
        preferred_element_type=jnp.float32)                           # [tn, K]

    # dist = 0.5*||e||^2 - x.e   (argmin-equivalent to the full expression).
    dist = half_e2_ref[...] - xe                                      # [tn, K]

    # First-occurrence argmin over K (matches torch.argmin tie-breaking).
    min_d = jnp.min(dist, axis=1, keepdims=True)                      # [tn, 1]
    iota_k = jax.lax.broadcasted_iota(jnp.int32, (tn, k), 1)          # [tn, K]
    inds = jnp.min(jnp.where(dist == min_d, iota_k, k), axis=1)       # [tn]

    # one_hot @ embedding == gather of the nearest codes (MXU, exact in f32).
    one_hot = (iota_k == inds[:, None]).astype(jnp.float32)           # [tn, K]
    q = jnp.dot(one_hot, e, preferred_element_type=jnp.float32)       # [tn, D]
    q_ref[...] = q.astype(q_ref.dtype)

    # Per-tile SSE partial; rows beyond the true N (padding) are masked out.
    # Stored into an 8-sublane block (row 0 carries the column sums, rows 1..7
    # are zero) so the output block shape is (8, D) instead of a masked
    # single-row store.
    row0 = pl.program_id(0) * tile_n
    row_ids = row0 + jax.lax.broadcasted_iota(jnp.int32, (tn, 1), 0)  # [tn, 1]
    diff = jnp.where(row_ids < n_valid, q - x, 0.0)                   # [tn, D]
    colsum = jnp.sum(diff * diff, axis=0, keepdims=True)              # [1, D]
    sub = jax.lax.broadcasted_iota(jnp.int32, (8, d), 0)              # [8, D]
    partial_ref[...] = jnp.where(sub == 0, colsum, 0.0)


def vector_quantize(latents_nchw, embedding, beta=0.25, tile_n=512):
    """latents_nchw: [B, D, H, W], embedding: [K, D]. Returns (quantized NCHW, vq_loss)."""
    B, D, H, W = latents_nchw.shape
    K, D2 = embedding.shape
    assert D == D2
    N = B * H * W

    # --- tile sizing --------------------------------------------------------
    # Large tiles amortize the ~0.35us per-grid-step overhead; keep sublane
    # multiples and clamp to the problem size.
    n8 = _round_up(N, 8)
    tile_n = max(8, min(_round_up(tile_n, 8), n8))
    # Cap the [tn, K] f32 temporaries (dist / iota / one_hot / xe) plus the
    # in/out tile blocks to ~24 MiB so the same tiling fits v7x's 64 MiB
    # physical VMEM as well as v5e/v6e's 128 MiB.
    while tile_n > 8 and (4 * tile_n * K + 4 * tile_n * D) * 4 > (24 << 20):
        tile_n = max(8, _round_up(tile_n // 2, 8))
    # Ensure >= 2 grid steps so the "parallel" axis can shard across v7x's
    # two TensorCores (no effect on single-TC v5e/v6e).
    if tile_n >= n8 and n8 >= 16:
        tile_n = _round_up(pl.cdiv(n8, 2), 8)
    n_pad = _round_up(N, tile_n)
    num_tiles = n_pad // tile_n

    # NCHW -> NHWC -> [N, D] (+ zero padding only when N is not tile-aligned).
    # TODO(synk): keep activations NHWC upstream so this transpose (and the
    # inverse one below) stop costing extra HBM round trips around the kernel.
    flat = jnp.transpose(latents_nchw, (0, 2, 3, 1)).reshape(N, D)
    if n_pad != N:
        flat = jnp.pad(flat, ((0, n_pad - N), (0, 0)))

    # Codebook-invariant term hoisted out of the kernel (was recomputed every
    # grid step): 0.5 * ||e||^2, shape [1, K].
    emb_f32 = embedding.astype(jnp.float32)
    half_e2 = 0.5 * jnp.sum(emb_f32 * emb_f32, axis=1)[None, :]

    kernel = functools.partial(_vq_kernel, n_valid=N, tile_n=tile_n)

    itemsize = jnp.dtype(latents_nchw.dtype).itemsize
    cost = pl.CostEstimate(
        flops=4 * n_pad * K * D,                                  # two MXU matmuls
        transcendentals=0,
        bytes_accessed=(2 * n_pad * D * itemsize + (K * D + K) * 4
                        + num_tiles * 8 * D * 4),
    )

    # VMEM budget: double-buffered x/q tiles + resident codebook/half_e2 +
    # the [tn, K] temporaries + headroom. Explicit so v5e's 16 MiB default
    # scoped limit doesn't silently constrain larger tiles; capped at v7x's
    # 64 MiB physical VMEM.
    vmem_bytes = (4 * tile_n * D * itemsize          # x + q, double-buffered
                  + 2 * (K * D + K) * 4              # codebook + half_e2
                  + 4 * tile_n * K * 4               # dist/iota/one_hot/xe
                  + 2 * 8 * D * 4                    # SSE partial block
                  + (4 << 20))                       # headroom
    vmem_limit = int(min(max(vmem_bytes, 16 << 20), 64 << 20))

    q_flat, partials = pl.pallas_call(
        kernel,
        out_shape=(
            jax.ShapeDtypeStruct((n_pad, D), latents_nchw.dtype),
            jax.ShapeDtypeStruct((num_tiles * 8, D), jnp.float32),
        ),
        grid_spec=pltpu.PrefetchScalarGridSpec(
            num_scalar_prefetch=0,
            grid=(num_tiles,),
            in_specs=[
                pl.BlockSpec((tile_n, D), lambda i: (i, 0)),      # latents tile
                pl.BlockSpec((1, K), lambda i: (0, 0)),           # 0.5*||e||^2
                # Constant block index -> Pallas does not re-DMA the codebook
                # between grid steps.
                # TODO(synk): on v7x with K >= ~4096, single-buffer this block
                # (pipeline_mode=pl.Buffered(1)) and tile the grid over K with
                # a carried running (min, argmin) in VMEM scratch so the
                # [tn, K] temporaries stay inside the 64 MiB VMEM budget.
                pl.BlockSpec((K, D), lambda i: (0, 0)),
            ],
            out_specs=[
                pl.BlockSpec((tile_n, D), lambda i: (i, 0)),      # quantized tile
                pl.BlockSpec((8, D), lambda i: (i, 0)),           # SSE partial
            ],
        ),
        compiler_params=pltpu.CompilerParams(
            dimension_semantics=("parallel",),
            vmem_limit_bytes=vmem_limit,
        ),
        cost_estimate=cost,
    )(flat, half_e2, embedding)

    sse = jnp.sum(partials)
    mse = sse / jnp.float32(N * D)
    # commitment_loss and embedding_loss have identical forward values;
    # detach() only changes gradients.
    vq_loss = beta * mse + mse
    # TODO(synk): wrap in jax.custom_vjp for training use (straight-through
    # estimator for the latents + the detach()-split beta*mse + mse gradients);
    # pallas_call is not differentiable by default.

    q_nhwc = q_flat[:N].reshape(B, H, W, D)
    q_nchw = jnp.transpose(q_nhwc, (0, 3, 1, 2))
    return q_nchw, vq_loss


if __name__ == "__main__":
    key = jax.random.PRNGKey(0)
    k_lat, k_emb = jax.random.split(key)

    B, D, H, W = 2, 64, 8, 8          # embedding_dim = 64 (as in the module)
    K = 128                            # num_embeddings
    beta = 0.25

    latents = jax.random.normal(k_lat, (B, D, H, W), dtype=jnp.float32)
    # nn.Embedding weight init: uniform(-1/K, 1/K)
    embedding = jax.random.uniform(
        k_emb, (K, D), dtype=jnp.float32, minval=-1.0 / K, maxval=1.0 / K)

    quantized, vq_loss = vector_quantize(latents, embedding, beta=beta)
    jax.block_until_ready((quantized, vq_loss))

    # quick sanity check against plain-JAX reference (HIGHEST precision so the
    # reference argmin is as accurate as the kernel's f32 distances).
    lat_nhwc = jnp.transpose(latents, (0, 2, 3, 1)).reshape(-1, D)
    dist = (jnp.sum(lat_nhwc ** 2, 1, keepdims=True)
            + jnp.sum(embedding ** 2, 1)[None, :]
            - 2.0 * jnp.dot(lat_nhwc, embedding.T,
                            precision=jax.lax.Precision.HIGHEST))
    inds = jnp.argmin(dist, axis=1)
    q_ref = embedding[inds].reshape(B, H, W, D).transpose(0, 3, 1, 2)
    mse_ref = jnp.mean((q_ref - latents) ** 2)
    loss_ref = beta * mse_ref + mse_ref
    assert jnp.allclose(quantized, q_ref, atol=1e-5), "quantized mismatch"
    assert jnp.allclose(vq_loss, loss_ref, atol=1e-5), "loss mismatch"

    print("KERNEL_OK")
</pallas_src>

<mosaic_0001>
module attributes {stable_mosaic.version = 11 : i64} {
  func.func @_vq_kernel(%arg0: i32, %arg1: memref<64x64xf32, #tpu.memory_space<vmem>>, %arg2: memref<1x128xf32, #tpu.memory_space<vmem>>, %arg3: memref<128x64xf32, #tpu.memory_space<vmem>>, %arg4: memref<64x64xf32, #tpu.memory_space<vmem>>, %arg5: memref<8x64xf32, #tpu.memory_space<vmem>>) attributes {dimension_semantics = [#tpu.dimension_semantics<parallel>], iteration_bounds = array<i64: 2>, scalar_prefetch = 0 : i64, scratch_operands = 0 : i64, tpu.core_type = #tpu.core_type<tc>, window_params = [{transform_indices = @transform_0, window_bounds = array<i64: 64, 64>}, {pipeline_mode = #tpu.pipeline_mode<synchronous>, transform_indices = @transform_1, window_bounds = array<i64: 1, 128>}, {pipeline_mode = #tpu.pipeline_mode<synchronous>, transform_indices = @transform_2, window_bounds = array<i64: 128, 64>}, {transform_indices = @transform_3, window_bounds = array<i64: 64, 64>}, {transform_indices = @transform_4, window_bounds = array<i64: 8, 64>}]} {
    %c0 = arith.constant 0 : index
    %c0_0 = arith.constant 0 : index
    %0 = vector.load %arg1[%c0, %c0_0] : memref<64x64xf32, #tpu.memory_space<vmem>>, vector<64x64xf32>
    %c0_1 = arith.constant 0 : index
    %c0_2 = arith.constant 0 : index
    %1 = vector.load %arg3[%c0_1, %c0_2] : memref<128x64xf32, #tpu.memory_space<vmem>>, vector<128x64xf32>
    %cst = arith.constant dense<0.000000e+00> : vector<64x128xf32>
    %2 = tpu.matmul %0, %1, %cst {dimension_numbers = #tpu.dot_dimension_numbers<[1], [1], [0], [0], [0, 0, 1, 0], [], []>} : vector<64x64xf32>, vector<128x64xf32>, vector<64x128xf32> -> vector<64x128xf32>
    %c0_3 = arith.constant 0 : index
    %c0_4 = arith.constant 0 : index
    %3 = vector.load %arg2[%c0_3, %c0_4] : memref<1x128xf32, #tpu.memory_space<vmem>>, vector<1x128xf32>
    %4 = vector.broadcast %3 : vector<1x128xf32> to vector<64x128xf32>
    %5 = arith.subf %4, %2 : vector<64x128xf32>
    %cst_5 = arith.constant dense<0x7F800000> : vector<64xf32>
    %6 = vector.multi_reduction <minimumf>, %5, %cst_5 [1] : vector<64x128xf32> to vector<64xf32>
    %7 = vector.shape_cast %6 : vector<64xf32> to vector<64x1xf32>
    %8 = tpu.iota {dimensions = array<i32: 1>} : vector<64x128xi32>
    %9 = vector.broadcast %7 : vector<64x1xf32> to vector<64x128xf32>
    %10 = arith.cmpf oeq, %5, %9 : vector<64x128xf32>
    %c128_i32 = arith.constant 128 : i32
    %11 = vector.broadcast %c128_i32 : i32 to vector<64x128xi32>
    %12 = arith.select %10, %8, %11 : vector<64x128xi1>, vector<64x128xi32>
    %cst_6 = arith.constant dense<2147483647> : vector<64xi32>
    %13 = vector.multi_reduction <minsi>, %12, %cst_6 [1] : vector<64x128xi32> to vector<64xi32>
    %14 = vector.shape_cast %13 : vector<64xi32> to vector<64x1xi32>
    %15 = vector.broadcast %14 : vector<64x1xi32> to vector<64x128xi32>
    %16 = arith.cmpi eq, %8, %15 : vector<64x128xi32>
    %17 = arith.extui %16 : vector<64x128xi1> to vector<64x128xi32>
    %18 = arith.sitofp %17 : vector<64x128xi32> to vector<64x128xf32>
    %cst_7 = arith.constant dense<0.000000e+00> : vector<64x64xf32>
    %19 = tpu.matmul %18, %1, %cst_7 {dimension_numbers = #tpu.dot_dimension_numbers<[1], [0], [0], [1], [0, 0, 1, 1], [], []>} : vector<64x128xf32>, vector<128x64xf32>, vector<64x64xf32> -> vector<64x64xf32>
    %c0_8 = arith.constant 0 : index
    %c0_9 = arith.constant 0 : index
    %20 = vector.load %arg4[%c0_8, %c0_9] : memref<64x64xf32, #tpu.memory_space<vmem>>, vector<64x64xf32>
    tpu.vector_store %arg4[%c0_8, %c0_9], %19 {strides = array<i32>} : memref<64x64xf32, #tpu.memory_space<vmem>>, vector<64x64xf32>,
    %c64_i32 = arith.constant 64 : i32
    %21 = arith.muli %arg0, %c64_i32 : i32
    %22 = tpu.iota {dimensions = array<i32: 0>} : vector<64x1xi32>
    %23 = vector.broadcast %21 : i32 to vector<64x1xi32>
    %24 = arith.addi %23, %22 : vector<64x1xi32>
    %c128_i32_10 = arith.constant 128 : i32
    %25 = vector.broadcast %c128_i32_10 : i32 to vector<64x1xi32>
    %26 = arith.cmpi slt, %24, %25 : vector<64x1xi32>
    %27 = arith.subf %19, %0 : vector<64x64xf32>
    %cst_11 = arith.constant 0.000000e+00 : f32
    %28 = vector.shape_cast %26 : vector<64x1xi1> to vector<64x1xi1>
    %29 = vector.broadcast %28 : vector<64x1xi1> to vector<64x64xi1>
    %30 = vector.broadcast %cst_11 : f32 to vector<64x64xf32>
    %31 = arith.select %29, %27, %30 : vector<64x64xi1>, vector<64x64xf32>
    %32 = arith.mulf %31, %31 : vector<64x64xf32>
    %cst_12 = arith.constant dense<0.000000e+00> : vector<64xf32>
    %33 = vector.multi_reduction <add>, %32, %cst_12 [0] : vector<64x64xf32> to vector<64xf32>
    %34 = vector.shape_cast %33 : vector<64xf32> to vector<1x64xf32>
    %35 = tpu.iota {dimensions = array<i32: 0>} : vector<8x64xi32>
    %c0_i32 = arith.constant 0 : i32
    %36 = vector.broadcast %c0_i32 : i32 to vector<8x64xi32>
    %37 = arith.cmpi eq, %35, %36 : vector<8x64xi32>
    %cst_13 = arith.constant 0.000000e+00 : f32
    %38 = vector.shape_cast %34 : vector<1x64xf32> to vector<1x64xf32>
    %39 = vector.broadcast %38 : vector<1x64xf32> to vector<8x64xf32>
    %40 = vector.broadcast %cst_13 : f32 to vector<8x64xf32>
    %41 = arith.select %37, %39, %40 : vector<8x64xi1>, vector<8x64xf32>
    %c0_14 = arith.constant 0 : index
    %c0_15 = arith.constant 0 : index
    %42 = vector.load %arg5[%c0_14, %c0_15] : memref<8x64xf32, #tpu.memory_space<vmem>>, vector<8x64xf32>
    tpu.vector_store %arg5[%c0_14, %c0_15], %41 {strides = array<i32>} : memref<8x64xf32, #tpu.memory_space<vmem>>, vector<8x64xf32>,
    return
  }
  func.func @transform_0(%arg0: i32) -> (i32, i32) {
    %c0_i32 = arith.constant 0 : i32
    %c0_i32_0 = arith.constant 0 : i32
    return %arg0, %c0_i32 : i32, i32
  }
  func.func @transform_1(%arg0: i32) -> (i32, i32) {
    %c0_i32 = arith.constant 0 : i32
    %c0_i32_0 = arith.constant 0 : i32
    %c0_i32_1 = arith.constant 0 : i32
    return %c0_i32, %c0_i32_0 : i32, i32
  }
  func.func @transform_2(%arg0: i32) -> (i32, i32) {
    %c0_i32 = arith.constant 0 : i32
    %c0_i32_0 = arith.constant 0 : i32
    %c0_i32_1 = arith.constant 0 : i32
    return %c0_i32, %c0_i32_0 : i32, i32
  }
  func.func @transform_3(%arg0: i32) -> (i32, i32) {
    %c0_i32 = arith.constant 0 : i32
    %c0_i32_0 = arith.constant 0 : i32
    return %arg0, %c0_i32 : i32, i32
  }
  func.func @transform_4(%arg0: i32) -> (i32, i32) {
    %c0_i32 = arith.constant 0 : i32
    %c0_i32_0 = arith.constant 0 : i32
    return %arg0, %c0_i32 : i32, i32
  }
}

</mosaic_0001>

<llo_original>
// kernel: tpu_custom_call.1
$region0: #{tpu_custom_call.1}
  #allocation0 [shape = 'u32[]', space=smem, size = 0x4, offset = 0x4, fixed_abs, tag = 'smem constant byte address 0x4 - core index']
  #allocation1 [shape = 'u32[144,128]{1,0:T(1,128)}', space=vmem, size = 0x12000, scoped, tag = 'internal scratch']
  %s0 = inlined_call_operand.vmem [shape: f32[128,64], index: 0, kind: input, shape index: {}]
  %s1 = inlined_call_operand.vmem [shape: f32[1,128], index: 1, kind: input, shape index: {}]
  %s2 = inlined_call_operand.vmem [shape: f32[128,64], index: 2, kind: input, shape index: {}]
  %s3 = inlined_call_operand.vmem [shape: f32[128,64], index: 3, kind: output, shape index: {0}]
  %s4 = inlined_call_operand.hbm [shape: f32[16,64], index: 4, kind: output, shape index: {1}]
  %5 = xla_tuple %s3, %s4
  %s6 = sld [smem:[#allocation0]]
  $region53: #{tpu_custom_call.1} parent=0
    _
  %s8 = ssub.s32 1, %s6
  %s9 = scalar_select 0, %s8, %s6
  $region1: #{tpu_custom_call.1} parent=0
    #allocation2 [shape = 'u8[8192]{0}', space=vmem, size = 0x2000, scoped, tag = 'output window, operand 1']
    #allocation3 [shape = 's32[2]{0}', space=sflag, size = 0x8, scoped, tag = 'scoped memory for tpu_custom_call.1']
    %10 = vsyncpa [#allocation3], 0
    %s11 = scalar_lea.sflag [#allocation3], 1
    %12 = vsyncpa %s11, 0
    loop: start=0, step=1, limit=4
    $region2: #{tpu_custom_call.1} parent=1 // loop_pre_header
      _
    $region3: #{tpu_custom_call.1} parent=1 // loop_header
      %s14 = sphi 0, %s18
      %p15 = scmp.ge.s32.totalorder %s14, 4
      %s24 = sphi 0, %s26
      %s27 = sphi 0, %s24
      %s28 = sphi 0, %s27
      %s44 = sphi 0, %s28
      %s48 = sphi 0, %s48
      %s50 = sphi 0, %s48
      %s51 = sphi 0, %s50
      %s65 = sphi 0, %s51
      %s69 = sphi 0, %s69
      %s71 = sphi 0, %s69
      %s72 = sphi 0, %s71
      %s86 = sphi 0, %s72
      %s92 = sphi 0, %s94
      %s95 = sphi 0, %s92
      %s96 = sphi 0, %s95
      %s112 = sphi 0, %s96
      %s118 = sphi 0, %s120
      %s121 = sphi 0, %s118
      %s122 = sphi 0, %s121
      %s138 = sphi 0, %s122
    $region4: #{tpu_custom_call.1} parent=1 // loop_header_branch
      %17 = sbr.rel (%p15) target = $region8
    $region5: #{tpu_custom_call.1} parent=1 // loop_body
      %s19 = ssub.s32 %s14, 1
      %s20 = ssub.s32 %s14, 2
      %s21 = sadd.s32 %s14, 1
      %s22 = ssub.s32 %s14, %s21
      %p23 = scmp.eq.s32.totalorder %s22, 0
      %s25 = sadd.s32 %s24, 1
      %s26 = scalar_select %p23, %s24, %s25
      %p29 = pneg %p23
      %p30 = scmp.eq.s32.totalorder %s14, 1
      %p31 = por %p29, %p30
      %p32 = scmp.ne.s32.totalorder %s24, %s27
      %p33 = scmp.eq.s32.totalorder %s14, 0
      %p34 = por %p32, %p33
      %p35 = scmp.ne.s32.totalorder %s24, %s27
      %p36 = scmp.eq.s32.totalorder %s19, 1
      %p37 = por %p35, %p36
      %p38 = scmp.ne.s32.totalorder %s27, %s28
      %p39 = scmp.eq.s32.totalorder %s19, 0
      %p40 = por %p38, %p39
      %p41 = scmp.ne.s32.totalorder %s27, %s28
      %p42 = scmp.eq.s32.totalorder %s20, 1
      %p43 = por %p41, %p42
      %p45 = scmp.ne.s32.totalorder %s28, %s44
      %p46 = scmp.eq.s32.totalorder %s20, 0
      %p47 = por %p45, %p46
      %s49 = sadd.s32 %s48, 1
      %p52 = scmp.eq.s32.totalorder %s14, 1
      %p53 = scmp.ne.s32.totalorder %s48, %s50
      %p54 = scmp.eq.s32.totalorder %s14, 0
      %p55 = por %p53, %p54
      %p56 = scmp.ne.s32.totalorder %s48, %s50
      %p57 = scmp.eq.s32.totalorder %s19, 1
      %p58 = por %p56, %p57
      %p59 = scmp.ne.s32.totalorder %s50, %s51
      %p60 = scmp.eq.s32.totalorder %s19, 0
      %p61 = por %p59, %p60
      %p62 = scmp.ne.s32.totalorder %s50, %s51
      %p63 = scmp.eq.s32.totalorder %s20, 1
      %p64 = por %p62, %p63
      %p66 = scmp.ne.s32.totalorder %s51, %s65
      %p67 = scmp.eq.s32.totalorder %s20, 0
      %p68 = por %p66, %p67
      %s70 = sadd.s32 %s69, 1
      %p73 = scmp.eq.s32.totalorder %s14, 1
      %p74 = scmp.ne.s32.totalorder %s69, %s71
      %p75 = scmp.eq.s32.totalorder %s14, 0
      %p76 = por %p74, %p75
      %p77 = scmp.ne.s32.totalorder %s69, %s71
      %p78 = scmp.eq.s32.totalorder %s19, 1
      %p79 = por %p77, %p78
      %p80 = scmp.ne.s32.totalorder %s71, %s72
      %p81 = scmp.eq.s32.totalorder %s19, 0
      %p82 = por %p80, %p81
      %p83 = scmp.ne.s32.totalorder %s71, %s72
      %p84 = scmp.eq.s32.totalorder %s20, 1
      %p85 = por %p83, %p84
      %p87 = scmp.ne.s32.totalorder %s72, %s86
      %p88 = scmp.eq.s32.totalorder %s20, 0
      %p89 = por %p87, %p88
      %s90 = ssub.s32 %s14, %s21
      %p91 = scmp.eq.s32.totalorder %s90, 0
      %s93 = sadd.s32 %s92, 1
      %s94 = scalar_select %p91, %s92, %s93
      %p97 = pneg %p91
      %p98 = scmp.eq.s32.totalorder %s14, 1
      %p99 = por %p97, %p98
      %p100 = scmp.ne.s32.totalorder %s92, %s95
      %p101 = scmp.eq.s32.totalorder %s14, 0
      %p102 = por %p100, %p101
      %p103 = scmp.ne.s32.totalorder %s92, %s95
      %p104 = scmp.eq.s32.totalorder %s19, 1
      %p105 = por %p103, %p104
      %p106 = scmp.ne.s32.totalorder %s95, %s96
      %p107 = scmp.eq.s32.totalorder %s19, 0
      %p108 = por %p106, %p107
      %p109 = scmp.ne.s32.totalorder %s95, %s96
      %p110 = scmp.eq.s32.totalorder %s20, 1
      %p111 = por %p109, %p110
      %p113 = scmp.ne.s32.totalorder %s96, %s112
      %p114 = scmp.eq.s32.totalorder %s20, 0
      %p115 = por %p113, %p114
      %s116 = ssub.s32 %s14, %s21
      %p117 = scmp.eq.s32.totalorder %s116, 0
      %s119 = sadd.s32 %s118, 1
      %s120 = scalar_select %p117, %s118, %s119
      %p123 = pneg %p117
      %p124 = scmp.eq.s32.totalorder %s14, 1
      %p125 = por %p123, %p124
      %p126 = scmp.ne.s32.totalorder %s118, %s121
      %p127 = scmp.eq.s32.totalorder %s14, 0
      %p128 = por %p126, %p127
      %p129 = scmp.ne.s32.totalorder %s118, %s121
      %p130 = scmp.eq.s32.totalorder %s19, 1
      %p131 = por %p129, %p130
      %p132 = scmp.ne.s32.totalorder %s121, %s122
      %p133 = scmp.eq.s32.totalorder %s19, 0
      %p134 = por %p132, %p133
      %p135 = scmp.ne.s32.totalorder %s121, %s122
      %p136 = scmp.eq.s32.totalorder %s20, 1
      %p137 = por %p135, %p136
      %p139 = scmp.ne.s32.totalorder %s122, %s138
      %p140 = scmp.eq.s32.totalorder %s20, 0
      %p141 = por %p139, %p140
      %p142 = scmp.le.s32.totalorder 1, %s14
      %p143 = scmp.lt.s32.totalorder %s14, 3
      %p144 = pnand %p142, %p143
      %p145 = pneg %p144
      // Predicated region
      $region9: #{tpu_custom_call.1} parent=5 // pred_check
        _
      $region10: #{tpu_custom_call.1} parent=5 // pred_check_branch
        %147 = sbr.rel (%p144) target = $region12
      $region11: #{tpu_custom_call.1} parent=5 // pred_region
        %s148 = ssub.s32 %s14, 1
        // Predicated region
        $region13: #{tpu_custom_call.1} parent=11 // pred_check
          %p149 = pneg %p61
        $region14: #{tpu_custom_call.1} parent=11 // pred_check_branch
          %151 = sbr.rel (%p149) target = $region16
        $region15: #{tpu_custom_call.1} parent=11 // pred_region
          _
        $region16: #{tpu_custom_call.1} parent=11 // pred_fallthru
          _
        // Predicated region
        $region17: #{tpu_custom_call.1} parent=11 // pred_check
          %p152 = pneg %p82
        $region18: #{tpu_custom_call.1} parent=11 // pred_check_branch
          %154 = sbr.rel (%p152) target = $region20
        $region19: #{tpu_custom_call.1} parent=11 // pred_region
          _
        $region20: #{tpu_custom_call.1} parent=11 // pred_fallthru
          _
      $region12: #{tpu_custom_call.1} parent=5 // pred_fallthru
        _
      %p155 = scmp.lt.s32.totalorder %s14, 2
      // Predicated region
      $region21: #{tpu_custom_call.1} parent=5 // pred_check
        %p156 = pneg %p155
      $region22: #{tpu_custom_call.1} parent=5 // pred_check_branch
        %158 = sbr.rel (%p156) target = $region24
      $region23: #{tpu_custom_call.1} parent=5 // pred_region
        // Predicated region
        $region25: #{tpu_custom_call.1} parent=23 // pred_check
          %p159 = pneg %p34
        $region26: #{tpu_custom_call.1} parent=23 // pred_check_branch
          %161 = sbr.rel (%p159) target = $region28
        $region27: #{tpu_custom_call.1} parent=23 // pred_region
          %s162 = smul.u32 8, %s14
          %p163 = scmp.lt.s32.totalorder %s162, 15
          %s164 = scalar_select %p163, %s162, 15
          %s165 = smul.addr %s164, 8
          %s166 = scalar_lea.vmem %s0, %s165
          %s167 = smul.u32 8, %s14
        $region28: #{tpu_custom_call.1} parent=23 // pred_fallthru
          _
      $region24: #{tpu_custom_call.1} parent=5 // pred_fallthru
        _
      %p168 = scmp.le.s32.totalorder 1, %s14
      %p169 = scmp.lt.s32.totalorder %s14, 3
      %p170 = pnand %p168, %p169
      %p171 = pneg %p170
      // Predicated region
      $region29: #{tpu_custom_call.1} parent=5 // pred_check
        _
      $region30: #{tpu_custom_call.1} parent=5 // pred_check_branch
        %173 = sbr.rel (%p170) target = $region32
      $region31: #{tpu_custom_call.1} parent=5 // pred_region
        %s174 = ssub.s32 %s14, 1
        %s175 = smul.u32 8, %s19
        %p176 = scmp.lt.s32.totalorder %s175, 15
        %s177 = scalar_select %p176, %s175, 15
        %s178 = smul.addr %s177, 8
        %s179 = scalar_lea.vmem %s0, %s178
        %p180 = pneg %p40
        %p181 = pneg %p37
        %p182 = pneg %p61
        %p183 = pneg %p58
        %p184 = pneg %p82
        %p185 = pneg %p79
        %p186 = pneg %p108
        %p187 = pneg %p105
        %s188 = smul.u32 8, %s19
        %p189 = scmp.lt.s32.totalorder %s188, 15
        %s190 = scalar_select %p189, %s188, 15
        %s191 = smul.addr %s190, 8
        %s192 = scalar_lea.vmem %s3, %s191
        %p193 = pneg %p134
        %p194 = pneg %p131
        %s195 = sand.u32 %s121, 1
        %s196 = scalar_lea.sflag [#allocation3], %s195
        %s197 = sand.u32 %s121, 1
        %s198 = smul.addr %s197, 8
        %s199 = scalar_lea.vmem [#allocation2], %s198
        %s200 = smul.u32 8, %s19
        %p201 = scmp.lt.s32.totalorder %s200, 15
        %s202 = scalar_select %p201, %s200, 15
        %s203 = smul.addr %s202, 8
        %s204 = scalar_lea.vmem %s0, %s203
        %s205 = smul.u32 8, %s19
        %s206 = smul.u32 8, %s19
        %p207 = scmp.lt.s32.totalorder %s206, 15
        %s208 = scalar_select %p207, %s206, 15
        %s209 = smul.addr %s208, 8
        %s210 = scalar_lea.vmem %s3, %s209
        %s211 = smul.u32 8, %s19
        %v212 = vld [vmem:[%s204] sm:$0xff]
        %v213 = vld [vmem:[%s204 + $0x8] sm:$0xff]
        %v214 = vld [vmem:[%s204 + $0x10] sm:$0xff]
        %v215 = vld [vmem:[%s204 + $0x18] sm:$0xff]
        %v216 = vld [vmem:[%s204 + $0x20] sm:$0xff]
        %v217 = vld [vmem:[%s204 + $0x28] sm:$0xff]
        %v218 = vld [vmem:[%s204 + $0x30] sm:$0xff]
        %v219 = vld [vmem:[%s204 + $0x38] sm:$0xff]
        %v220 = vld [vmem:[%s2] sm:$0xff]
        %v221 = vld [vmem:[%s2 + $0x8] sm:$0xff]
        %v222 = vld [vmem:[%s2 + $0x10] sm:$0xff]
        %v223 = vld [vmem:[%s2 + $0x18] sm:$0xff]
        %v224 = vld [vmem:[%s2 + $0x20] sm:$0xff]
        %v225 = vld [vmem:[%s2 + $0x28] sm:$0xff]
        %v226 = vld [vmem:[%s2 + $0x30] sm:$0xff]
        %v227 = vld [vmem:[%s2 + $0x38] sm:$0xff]
        %v228 = vld [vmem:[%s2 + $0x40] sm:$0xff]
        %v229 = vld [vmem:[%s2 + $0x48] sm:$0xff]
        %v230 = vld [vmem:[%s2 + $0x50] sm:$0xff]
        %v231 = vld [vmem:[%s2 + $0x58] sm:$0xff]
        %v232 = vld [vmem:[%s2 + $0x60] sm:$0xff]
        %v233 = vld [vmem:[%s2 + $0x68] sm:$0xff]
        %v234 = vld [vmem:[%s2 + $0x70] sm:$0xff]
        %v235 = vld [vmem:[%s2 + $0x78] sm:$0xff]
        %vm236 = vcmask 523264
        %v238 = vsel %vm236, %v212, 0
        %v241 = vsel %vm236, %v213, 0
        %v244 = vsel %vm236, %v214, 0
        %v247 = vsel %vm236, %v215, 0
        %v250 = vsel %vm236, %v216, 0
        %v253 = vsel %vm236, %v217, 0
        %v256 = vsel %vm236, %v218, 0
        %v259 = vsel %vm236, %v219, 0
        %v262 = vsel %vm236, %v220, 0
        %v265 = vsel %vm236, %v221, 0
        %v268 = vsel %vm236, %v222, 0
        %v271 = vsel %vm236, %v223, 0
        %v274 = vsel %vm236, %v224, 0
        %v277 = vsel %vm236, %v225, 0
        %v280 = vsel %vm236, %v226, 0
        %v283 = vsel %vm236, %v227, 0
        %v286 = vsel %vm236, %v228, 0
        %v289 = vsel %vm236, %v229, 0
        %v292 = vsel %vm236, %v230, 0
        %v295 = vsel %vm236, %v231, 0
        %v298 = vsel %vm236, %v232, 0
        %v301 = vsel %vm236, %v233, 0
        %v304 = vsel %vm236, %v234, 0
        %v307 = vsel %vm236, %v235, 0
        %309 = vmatprep.subr.mxu0 0.0
        %310 = vmatpush1.xpose.msra.mxu0 %v262
        %311 = vmatprep.subr.mxu0 0.0
        %312 = vmatpush1.xpose.msra.mxu0 %v265
        %313 = vmatprep.subr.mxu0 0.0
        %314 = vmatpush1.xpose.msra.mxu0 %v268
        %315 = vmatprep.subr.mxu0 0.0
        %316 = vmatpush1.xpose.msra.mxu0 %v271
        %317 = vmatprep.subr.mxu0 0.0
        %318 = vmatpush1.xpose.msra.mxu0 %v274
        %319 = vmatprep.subr.mxu0 0.0
        %320 = vmatpush1.xpose.msra.mxu0 %v277
        %321 = vmatprep.subr.mxu0 0.0
        %322 = vmatpush1.xpose.msra.mxu0 %v280
        %323 = vmatprep.subr.mxu0 0.0
        %324 = vmatpush1.xpose.msra.mxu0 %v283
        %325 = vmatprep.subr.mxu0 0.0
        %326 = vmatpush1.xpose.msra.mxu0 %v286
        %327 = vmatprep.subr.mxu0 0.0
        %328 = vmatpush1.xpose.msra.mxu0 %v289
        %329 = vmatprep.subr.mxu0 0.0
        %330 = vmatpush1.xpose.msra.mxu0 %v292
        %331 = vmatprep.subr.mxu0 0.0
        %332 = vmatpush1.xpose.msra.mxu0 %v295
        %333 = vmatprep.subr.mxu0 0.0
        %334 = vmatpush1.xpose.msra.mxu0 %v298
        %335 = vmatprep.subr.mxu0 0.0
        %336 = vmatpush1.xpose.msra.mxu0 %v301
        %337 = vmatprep.subr.mxu0 0.0
        %338 = vmatpush1.xpose.msra.mxu0 %v304
        %339 = vmatprep.subr.mxu0 0.0
        %340 = vmatpush1.xpose.msra.mxu0 %v307
        %341 = vmatprep.subr.mxu0 0.0
        %342 = vmatpush1.xpose.msra.mxu0 0.0
        %343 = vmatprep.subr.mxu0 0.0
        %344 = vmatpush1.xpose.msra.mxu0 0.0
        %345 = vmatprep.subr.mxu0 0.0
        %346 = vmatpush1.xpose.msra.mxu0 0.0
        %347 = vmatprep.subr.mxu0 0.0
        %348 = vmatpush1.xpose.msra.mxu0 0.0
        %349 = vmatprep.subr.mxu0 0.0
        %350 = vmatpush1.xpose.msra.mxu0 0.0
        %351 = vmatprep.subr.mxu0 0.0
        %352 = vmatpush1.xpose.msra.mxu0 0.0
        %353 = vmatprep.subr.mxu0 0.0
        %354 = vmatpush1.xpose.msra.mxu0 0.0
        %355 = vmatprep.subr.mxu0 0.0
        %356 = vmatpush1.xpose.msra.mxu0 0.0
        %357 = vmatprep.subr.mxu0 0.0
        %358 = vmatpush1.xpose.msra.mxu0 0.0
        %359 = vmatprep.subr.mxu0 0.0
        %360 = vmatpush1.xpose.msra.mxu0 0.0
        %361 = vmatprep.subr.mxu0 0.0
        %362 = vmatpush1.xpose.msra.mxu0 0.0
        %363 = vmatprep.subr.mxu0 0.0
        %364 = vmatpush1.xpose.msra.mxu0 0.0
        %365 = vmatprep.subr.mxu0 0.0
        %366 = vmatpush1.xpose.msra.mxu0 0.0
        %367 = vmatprep.subr.mxu0 0.0
        %368 = vmatpush1.xpose.msra.mxu0 0.0
        %369 = vmatprep.subr.mxu0 0.0
        %370 = vmatpush1.xpose.msra.mxu0 0.0
        %371 = vmatprep.subr.mxu0 0.0
        %372 = vmatpush1.xpose.msra.mxu0 0.0
        %373 = vmatprep.mubr.f32.mxu0 0.0
        %374 = vmatmul.mubr.f32.gmra.mrb[0].mxu0 %v238
        %v375 = vpop.f32.mrb[0].mxu0
        %v376 = vadd.f32 0.0, %v375
        %v377 = vpop.f32.mrb[0].mxu0
        %378 = vmatprep.mubr.f32.mxu0 0.0
        %379 = vmatmul.mubr.f32.gmra.mrb[0].mxu0 %v241
        %v380 = vpop.f32.mrb[0].mxu0
        %v381 = vadd.f32 0.0, %v380
        %v382 = vpop.f32.mrb[0].mxu0
        %383 = vmatprep.mubr.f32.mxu0 0.0
        %384 = vmatmul.mubr.f32.gmra.mrb[0].mxu0 %v244
        %v385 = vpop.f32.mrb[0].mxu0
        %v386 = vadd.f32 0.0, %v385
        %v387 = vpop.f32.mrb[0].mxu0
        %388 = vmatprep.mubr.f32.mxu0 0.0
        %389 = vmatmul.mubr.f32.gmra.mrb[0].mxu0 %v247
        %v390 = vpop.f32.mrb[0].mxu0
        %v391 = vadd.f32 0.0, %v390
        %v392 = vpop.f32.mrb[0].mxu0
        %393 = vmatprep.mubr.f32.mxu0 0.0
        %394 = vmatmul.mubr.f32.gmra.mrb[0].mxu0 %v250
        %v395 = vpop.f32.mrb[0].mxu0
        %v396 = vadd.f32 0.0, %v395
        %v397 = vpop.f32.mrb[0].mxu0
        %398 = vmatprep.mubr.f32.mxu0 0.0
        %399 = vmatmul.mubr.f32.gmra.mrb[0].mxu0 %v253
        %v400 = vpop.f32.mrb[0].mxu0
        %v401 = vadd.f32 0.0, %v400
        %v402 = vpop.f32.mrb[0].mxu0
        %403 = vmatprep.mubr.f32.mxu0 0.0
        %404 = vmatmul.mubr.f32.gmra.mrb[0].mxu0 %v256
        %v405 = vpop.f32.mrb[0].mxu0
        %v406 = vadd.f32 0.0, %v405
        %v407 = vpop.f32.mrb[0].mxu0
        %408 = vmatprep.mubr.f32.mxu0 0.0
        %409 = vmatmul.mubr.f32.gmra.mrb[0].mxu0 %v259
        %v410 = vpop.f32.mrb[0].mxu0
        %v411 = vadd.f32 0.0, %v410
        %v412 = vpop.f32.mrb[0].mxu0
        %413 = vdwg.mxu0
        %v414 = vld [vmem:[%s1] sm:$0x1]
        %v416 = vlaneseq
        %v417 = vshrl.u32 %v416, 7
        %v418 = vsub.s32 0, %v417
        %v419 = vrot.slane %v414, %v418
        %v421 = vsub.f32 %v419, %v376
        %v422 = vsub.f32 %v419, %v381
        %v423 = vsub.f32 %v419, %v386
        %v424 = vsub.f32 %v419, %v391
        %v425 = vsub.f32 %v419, %v396
        %v426 = vsub.f32 %v419, %v401
        %v427 = vsub.f32 %v419, %v406
        %v428 = vsub.f32 %v419, %v411
        %429 = vmin.xlane.f32.xlu0 %v421
        %v430 = vpop.xlane.xlu0 %429
        %431 = vmin.xlane.f32.xlu0 %v422
        %v432 = vpop.xlane.xlu0 %431
        %433 = vmin.xlane.f32.xlu0 %v423
        %v434 = vpop.xlane.xlu0 %433
        %435 = vmin.xlane.f32.xlu0 %v424
        %v436 = vpop.xlane.xlu0 %435
        %437 = vmin.xlane.f32.xlu0 %v425
        %v438 = vpop.xlane.xlu0 %437
        %439 = vmin.xlane.f32.xlu0 %v426
        %v440 = vpop.xlane.xlu0 %439
        %441 = vmin.xlane.f32.xlu0 %v427
        %v442 = vpop.xlane.xlu0 %441
        %443 = vmin.xlane.f32.xlu0 %v428
        %v444 = vpop.xlane.xlu0 %443
        %v445 = vlaneseq
        %v446 = vand.u32 %v445, 127
        %vm447 = vcmp.eq.f32.partialorder %v421, %v430
        %vm448 = vcmp.eq.f32.partialorder %v422, %v432
        %vm449 = vcmp.eq.f32.partialorder %v423, %v434
        %vm450 = vcmp.eq.f32.partialorder %v424, %v436
        %vm451 = vcmp.eq.f32.partialorder %v425, %v438
        %vm452 = vcmp.eq.f32.partialorder %v426, %v440
        %vm453 = vcmp.eq.f32.partialorder %v427, %v442
        %vm454 = vcmp.eq.f32.partialorder %v428, %v444
        %v455 = vsel %vm447, %v446, 128
        %v456 = vsel %vm448, %v446, 128
        %v457 = vsel %vm449, %v446, 128
        %v458 = vsel %vm450, %v446, 128
        %v459 = vsel %vm451, %v446, 128
        %v460 = vsel %vm452, %v446, 128
        %v461 = vsel %vm453, %v446, 128
        %v462 = vsel %vm454, %v446, 128
        %v463 = vand.u32 %v455, 65535
        %v464 = vshra.s32 %v455, 16
        %v465 = vcvt.s32.f32 %v463
        %v466 = vcvt.s32.f32 %v464
        %467 = vmin.xlane.f32.xlu0 %v466
        %v468 = vpop.xlane.xlu0 %467
        %vm469 = vcmp.eq.f32.partialorder %v466, %v468
        %v470 = vsel %vm469, %v465, inf
        %471 = vmin.xlane.f32.xlu0 %v470
        %v472 = vpop.xlane.xlu0 %471
        %v473 = vcvt.f32.s32 %v472
        %v474 = vcvt.f32.s32 %v468
        %v475 = vshll.u32 %v474, 16
        %v476 = vadd.s32 %v475, %v473
        %v477 = vand.u32 %v456, 65535
        %v478 = vshra.s32 %v456, 16
        %v479 = vcvt.s32.f32 %v477
        %v480 = vcvt.s32.f32 %v478
        %481 = vmin.xlane.f32.xlu0 %v480
        %v482 = vpop.xlane.xlu0 %481
        %vm483 = vcmp.eq.f32.partialorder %v480, %v482
        %v484 = vsel %vm483, %v479, inf
        %485 = vmin.xlane.f32.xlu0 %v484
        %v486 = vpop.xlane.xlu0 %485
        %v487 = vcvt.f32.s32 %v486
        %v488 = vcvt.f32.s32 %v482
        %v489 = vshll.u32 %v488, 16
        %v490 = vadd.s32 %v489, %v487
        %v491 = vand.u32 %v457, 65535
        %v492 = vshra.s32 %v457, 16
        %v493 = vcvt.s32.f32 %v491
        %v494 = vcvt.s32.f32 %v492
        %495 = vmin.xlane.f32.xlu0 %v494
        %v496 = vpop.xlane.xlu0 %495
        %vm497 = vcmp.eq.f32.partialorder %v494, %v496
        %v498 = vsel %vm497, %v493, inf
        %499 = vmin.xlane.f32.xlu0 %v498
        %v500 = vpop.xlane.xlu0 %499
        %v501 = vcvt.f32.s32 %v500
        %v502 = vcvt.f32.s32 %v496
        %v503 = vshll.u32 %v502, 16
        %v504 = vadd.s32 %v503, %v501
        %v505 = vand.u32 %v458, 65535
        %v506 = vshra.s32 %v458, 16
        %v507 = vcvt.s32.f32 %v505
        %v508 = vcvt.s32.f32 %v506
        %509 = vmin.xlane.f32.xlu0 %v508
        %v510 = vpop.xlane.xlu0 %509
        %vm511 = vcmp.eq.f32.partialorder %v508, %v510
        %v512 = vsel %vm511, %v507, inf
        %513 = vmin.xlane.f32.xlu0 %v512
        %v514 = vpop.xlane.xlu0 %513
        %v515 = vcvt.f32.s32 %v514
        %v516 = vcvt.f32.s32 %v510
        %v517 = vshll.u32 %v516, 16
        %v518 = vadd.s32 %v517, %v515
        %v519 = vand.u32 %v459, 65535
        %v520 = vshra.s32 %v459, 16
        %v521 = vcvt.s32.f32 %v519
        %v522 = vcvt.s32.f32 %v520
        %523 = vmin.xlane.f32.xlu0 %v522
        %v524 = vpop.xlane.xlu0 %523
        %vm525 = vcmp.eq.f32.partialorder %v522, %v524
        %v526 = vsel %vm525, %v521, inf
        %527 = vmin.xlane.f32.xlu0 %v526
        %v528 = vpop.xlane.xlu0 %527
        %v529 = vcvt.f32.s32 %v528
        %v530 = vcvt.f32.s32 %v524
        %v531 = vshll.u32 %v530, 16
        %v532 = vadd.s32 %v531, %v529
        %v533 = vand.u32 %v460, 65535
        %v534 = vshra.s32 %v460, 16
        %v535 = vcvt.s32.f32 %v533
        %v536 = vcvt.s32.f32 %v534
        %537 = vmin.xlane.f32.xlu0 %v536
        %v538 = vpop.xlane.xlu0 %537
        %vm539 = vcmp.eq.f32.partialorder %v536, %v538
        %v540 = vsel %vm539, %v535, inf
        %541 = vmin.xlane.f32.xlu0 %v540
        %v542 = vpop.xlane.xlu0 %541
        %v543 = vcvt.f32.s32 %v542
        %v544 = vcvt.f32.s32 %v538
        %v545 = vshll.u32 %v544, 16
        %v546 = vadd.s32 %v545, %v543
        %v547 = vand.u32 %v461, 65535
        %v548 = vshra.s32 %v461, 16
        %v549 = vcvt.s32.f32 %v547
        %v550 = vcvt.s32.f32 %v548
        %551 = vmin.xlane.f32.xlu0 %v550
        %v552 = vpop.xlane.xlu0 %551
        %vm553 = vcmp.eq.f32.partialorder %v550, %v552
        %v554 = vsel %vm553, %v549, inf
        %555 = vmin.xlane.f32.xlu0 %v554
        %v556 = vpop.xlane.xlu0 %555
        %v557 = vcvt.f32.s32 %v556
        %v558 = vcvt.f32.s32 %v552
        %v559 = vshll.u32 %v558, 16
        %v560 = vadd.s32 %v559, %v557
        %v561 = vand.u32 %v462, 65535
        %v562 = vshra.s32 %v462, 16
        %v563 = vcvt.s32.f32 %v561
        %v564 = vcvt.s32.f32 %v562
        %565 = vmin.xlane.f32.xlu0 %v564
        %v566 = vpop.xlane.xlu0 %565
        %vm567 = vcmp.eq.f32.partialorder %v564, %v566
        %v568 = vsel %vm567, %v563, inf
        %569 = vmin.xlane.f32.xlu0 %v568
        %v570 = vpop.xlane.xlu0 %569
        %v571 = vcvt.f32.s32 %v570
        %v572 = vcvt.f32.s32 %v566
        %v573 = vshll.u32 %v572, 16
        %v574 = vadd.s32 %v573, %v571
        %vm575 = vcmp.eq.s32.totalorder %v446, %v476
        %vm576 = vcmp.eq.s32.totalorder %v446, %v490
        %vm577 = vcmp.eq.s32.totalorder %v446, %v504
        %vm578 = vcmp.eq.s32.totalorder %v446, %v518
        %vm579 = vcmp.eq.s32.totalorder %v446, %v532
        %vm580 = vcmp.eq.s32.totalorder %v446, %v546
        %vm581 = vcmp.eq.s32.totalorder %v446, %v560
        %vm582 = vcmp.eq.s32.totalorder %v446, %v574
        %v583 = vsel %vm575, 1, 0
        %v584 = vsel %vm576, 1, 0
        %v585 = vsel %vm577, 1, 0
        %v586 = vsel %vm578, 1, 0
        %v587 = vsel %vm579, 1, 0
        %v588 = vsel %vm580, 1, 0
        %v589 = vsel %vm581, 1, 0
        %v590 = vsel %vm582, 1, 0
        %v591 = vcvt.s32.f32 %v583
        %v592 = vcvt.s32.f32 %v584
        %v593 = vcvt.s32.f32 %v585
        %v594 = vcvt.s32.f32 %v586
        %v595 = vcvt.s32.f32 %v587
        %v596 = vcvt.s32.f32 %v588
        %v597 = vcvt.s32.f32 %v589
        %v598 = vcvt.s32.f32 %v590
        %599 = vmatprep.subr.mxu0 0.0
        %600 = vmatpush1.msra.mxu0 %v220
        %601 = vmatprep.subr.mxu0 0.0
        %602 = vmatpush1.msra.mxu0 %v221
        %603 = vmatprep.subr.mxu0 0.0
        %604 = vmatpush1.msra.mxu0 %v222
        %605 = vmatprep.subr.mxu0 0.0
        %606 = vmatpush1.msra.mxu0 %v223
        %607 = vmatprep.subr.mxu0 0.0
        %608 = vmatpush1.msra.mxu0 %v224
        %609 = vmatprep.subr.mxu0 0.0
        %610 = vmatpush1.msra.mxu0 %v225
        %611 = vmatprep.subr.mxu0 0.0
        %612 = vmatpush1.msra.mxu0 %v226
        %613 = vmatprep.subr.mxu0 0.0
        %614 = vmatpush1.msra.mxu0 %v227
        %615 = vmatprep.subr.mxu0 0.0
        %616 = vmatpush1.msra.mxu0 %v228
        %617 = vmatprep.subr.mxu0 0.0
        %618 = vmatpush1.msra.mxu0 %v229
        %619 = vmatprep.subr.mxu0 0.0
        %620 = vmatpush1.msra.mxu0 %v230
        %621 = vmatprep.subr.mxu0 0.0
        %622 = vmatpush1.msra.mxu0 %v231
        %623 = vmatprep.subr.mxu0 0.0
        %624 = vmatpush1.msra.mxu0 %v232
        %625 = vmatprep.subr.mxu0 0.0
        %626 = vmatpush1.msra.mxu0 %v233
        %627 = vmatprep.subr.mxu0 0.0
        %628 = vmatpush1.msra.mxu0 %v234
        %629 = vmatprep.subr.mxu0 0.0
        %630 = vmatpush1.msra.mxu0 %v235
        %631 = vmatprep.subr.mxu0 0.0
        %632 = vmatpush1.msra.mxu0 0.0
        %633 = vmatprep.subr.mxu0 0.0
        %634 = vmatpush1.msra.mxu0 0.0
        %635 = vmatprep.subr.mxu0 0.0
        %636 = vmatpush1.msra.mxu0 0.0
        %637 = vmatprep.subr.mxu0 0.0
        %638 = vmatpush1.msra.mxu0 0.0
        %639 = vmatprep.subr.mxu0 0.0
        %640 = vmatpush1.msra.mxu0 0.0
        %641 = vmatprep.subr.mxu0 0.0
        %642 = vmatpush1.msra.mxu0 0.0
        %643 = vmatprep.subr.mxu0 0.0
        %644 = vmatpush1.msra.mxu0 0.0
        %645 = vmatprep.subr.mxu0 0.0
        %646 = vmatpush1.msra.mxu0 0.0
        %647 = vmatprep.subr.mxu0 0.0
        %648 = vmatpush1.msra.mxu0 0.0
        %649 = vmatprep.subr.mxu0 0.0
        %650 = vmatpush1.msra.mxu0 0.0
        %651 = vmatprep.subr.mxu0 0.0
        %652 = vmatpush1.msra.mxu0 0.0
        %653 = vmatprep.subr.mxu0 0.0
        %654 = vmatpush1.msra.mxu0 0.0
        %655 = vmatprep.subr.mxu0 0.0
        %656 = vmatpush1.msra.mxu0 0.0
        %657 = vmatprep.subr.mxu0 0.0
        %658 = vmatpush1.msra.mxu0 0.0
        %659 = vmatprep.subr.mxu0 0.0
        %660 = vmatpush1.msra.mxu0 0.0
        %661 = vmatprep.subr.mxu0 0.0
        %662 = vmatpush1.msra.mxu0 0.0
        %663 = vmatprep.mubr.f32.mxu0 0.0
        %664 = vmatmul.mubr.f32.gmra.mrb[0].mxu0 %v591
        %v665 = vpop.f32.mrb[0].mxu0
        %v666 = vadd.f32 0.0, %v665
        %v667 = vpop.f32.mrb[0].mxu0
        %668 = vmatprep.mubr.f32.mxu0 0.0
        %669 = vmatmul.mubr.f32.gmra.mrb[0].mxu0 %v592
        %v670 = vpop.f32.mrb[0].mxu0
        %v671 = vadd.f32 0.0, %v670
        %v672 = vpop.f32.mrb[0].mxu0
        %673 = vmatprep.mubr.f32.mxu0 0.0
        %674 = vmatmul.mubr.f32.gmra.mrb[0].mxu0 %v593
        %v675 = vpop.f32.mrb[0].mxu0
        %v676 = vadd.f32 0.0, %v675
        %v677 = vpop.f32.mrb[0].mxu0
        %678 = vmatprep.mubr.f32.mxu0 0.0
        %679 = vmatmul.mubr.f32.gmra.mrb[0].mxu0 %v594
        %v680 = vpop.f32.mrb[0].mxu0
        %v681 = vadd.f32 0.0, %v680
        %v682 = vpop.f32.mrb[0].mxu0
        %683 = vmatprep.mubr.f32.mxu0 0.0
        %684 = vmatmul.mubr.f32.gmra.mrb[0].mxu0 %v595
        %v685 = vpop.f32.mrb[0].mxu0
        %v686 = vadd.f32 0.0, %v685
        %v687 = vpop.f32.mrb[0].mxu0
        %688 = vmatprep.mubr.f32.mxu0 0.0
        %689 = vmatmul.mubr.f32.gmra.mrb[0].mxu0 %v596
        %v690 = vpop.f32.mrb[0].mxu0
        %v691 = vadd.f32 0.0, %v690
        %v692 = vpop.f32.mrb[0].mxu0
        %693 = vmatprep.mubr.f32.mxu0 0.0
        %694 = vmatmul.mubr.f32.gmra.mrb[0].mxu0 %v597
        %v695 = vpop.f32.mrb[0].mxu0
        %v696 = vadd.f32 0.0, %v695
        %v697 = vpop.f32.mrb[0].mxu0
        %698 = vmatprep.mubr.f32.mxu0 0.0
        %699 = vmatmul.mubr.f32.gmra.mrb[0].mxu0 %v598
        %v700 = vpop.f32.mrb[0].mxu0
        %v701 = vadd.f32 0.0, %v700
        %v702 = vpop.f32.mrb[0].mxu0
        %703 = vdwg.mxu0
        %704 = vst.msk [vmem:[%s210] sm:$0xff] %vm236, %v666
        %705 = vst.msk [vmem:[%s210 + $0x8] sm:$0xff] %vm236, %v671
        %706 = vst.msk [vmem:[%s210 + $0x10] sm:$0xff] %vm236, %v676
        %707 = vst.msk [vmem:[%s210 + $0x18] sm:$0xff] %vm236, %v681
        %708 = vst.msk [vmem:[%s210 + $0x20] sm:$0xff] %vm236, %v686
        %709 = vst.msk [vmem:[%s210 + $0x28] sm:$0xff] %vm236, %v691
        %710 = vst.msk [vmem:[%s210 + $0x30] sm:$0xff] %vm236, %v696
        %711 = vst.msk [vmem:[%s210 + $0x38] sm:$0xff] %vm236, %v701
        %s712 = smul.u32 %s19, 64
        %v713 = vlaneseq
        %v714 = vshrl.u32 %v713, 7
        %v715 = vadd.s32 %v714, 8
        %v716 = vadd.s32 %v714, 16
        %v717 = vadd.s32 %v714, 24
        %v718 = vadd.s32 %v714, 32
        %v719 = vadd.s32 %v714, 40
        %v720 = vadd.s32 %v714, 48
        %v721 = vadd.s32 %v714, 56
        %v722 = vstv %s712
        %v723 = vadd.s32 %v722, %v714
        %v724 = vadd.s32 %v722, %v715
        %v725 = vadd.s32 %v722, %v716
        %v726 = vadd.s32 %v722, %v717
        %v727 = vadd.s32 %v722, %v718
        %v728 = vadd.s32 %v722, %v719
        %v729 = vadd.s32 %v722, %v720
        %v730 = vadd.s32 %v722, %v721
        %vm731 = vcmp.lt.s32.totalorder %v723, 128
        %vm732 = vcmp.lt.s32.totalorder %v724, 128
        %vm733 = vcmp.lt.s32.totalorder %v725, 128
        %vm734 = vcmp.lt.s32.totalorder %v726, 128
        %vm735 = vcmp.lt.s32.totalorder %v727, 128
        %vm736 = vcmp.lt.s32.totalorder %v728, 128
        %vm737 = vcmp.lt.s32.totalorder %v729, 128
        %vm738 = vcmp.lt.s32.totalorder %v730, 128
        %v739 = vsub.f32 %v666, %v212
        %v740 = vsub.f32 %v671, %v213
        %v741 = vsub.f32 %v676, %v214
        %v742 = vsub.f32 %v681, %v215
        %v743 = vsub.f32 %v686, %v216
        %v744 = vsub.f32 %v691, %v217
        %v745 = vsub.f32 %v696, %v218
        %v746 = vsub.f32 %v701, %v219
        %v747 = vsel %vm731, 1, 0
        %v748 = vsel %vm732, 1, 0
        %v749 = vsel %vm733, 1, 0
        %v750 = vsel %vm734, 1, 0
        %v751 = vsel %vm735, 1, 0
        %v752 = vsel %vm736, 1, 0
        %v753 = vsel %vm737, 1, 0
        %v754 = vsel %vm738, 1, 0
        %vm755 = vcmp.eq.s32.totalorder %v747, 1
        %vm756 = vcmp.eq.s32.totalorder %v748, 1
        %vm757 = vcmp.eq.s32.totalorder %v749, 1
        %vm758 = vcmp.eq.s32.totalorder %v750, 1
        %vm759 = vcmp.eq.s32.totalorder %v751, 1
        %vm760 = vcmp.eq.s32.totalorder %v752, 1
        %vm761 = vcmp.eq.s32.totalorder %v753, 1
        %vm762 = vcmp.eq.s32.totalorder %v754, 1
        %v763 = vsel %vm755, %v739, 0.0
        %v764 = vsel %vm756, %v740, 0.0
        %v765 = vsel %vm757, %v741, 0.0
        %v766 = vsel %vm758, %v742, 0.0
        %v767 = vsel %vm759, %v743, 0.0
        %v768 = vsel %vm760, %v744, 0.0
        %v769 = vsel %vm761, %v745, 0.0
        %v770 = vsel %vm762, %v746, 0.0
        %v771 = vmul.f32 %v763, %v763
        %v772 = vmul.f32 %v764, %v764
        %v773 = vmul.f32 %v765, %v765
        %v774 = vmul.f32 %v766, %v766
        %v775 = vmul.f32 %v767, %v767
        %v776 = vmul.f32 %v768, %v768
        %v777 = vmul.f32 %v769, %v769
        %v778 = vmul.f32 %v770, %v770
        %v779 = vsel %vm236, %v771, 0.0
        %v780 = vsel %vm236, %v772, 0.0
        %v781 = vadd.f32 %v779, %v780
        %v782 = vsel %vm236, %v773, 0.0
        %v783 = vadd.f32 %v781, %v782
        %v784 = vsel %vm236, %v774, 0.0
        %v785 = vadd.f32 %v783, %v784
        %v786 = vsel %vm236, %v775, 0.0
        %v787 = vadd.f32 %v785, %v786
        %v788 = vsel %vm236, %v776, 0.0
        %v789 = vadd.f32 %v787, %v788
        %v790 = vsel %vm236, %v777, 0.0
        %v791 = vadd.f32 %v789, %v790
        %v792 = vsel %vm236, %v778, 0.0
        %v793 = vadd.f32 %v791, %v792
        %v794 = vrot.slane %v793, 4
        %v795 = vadd.f32 %v793, %v794
        %v796 = vrot.slane %v795, 2
        %v797 = vadd.f32 %v795, %v796
        %v798 = vrot.slane %v797, 1
        %v799 = vadd.f32 %v797, %v798
        %vm800 = vcmp.eq.s32.totalorder %v714, 0
        %v801 = vsel %vm800, %v799, 0.0
        %802 = vst.msk [vmem:[%s199] sm:$0xff] %vm236, %v801
        %s803 = smul.u32 8, %s19
        %p804 = scmp.lt.s32.totalorder %s803, 15
        %s805 = scalar_select %p804, %s803, 15
        %s806 = smul.addr %s805, 8
        %s807 = scalar_lea.vmem %s3, %s806
        %s808 = sand.u32 %s121, 1
        %s809 = scalar_lea.sflag [#allocation3], %s808
        %s810 = sand.u32 %s121, 1
        %s811 = smul.addr %s810, 8
        %s812 = scalar_lea.vmem [#allocation2], %s811
        // Predicated region
        $region33: #{tpu_custom_call.1} parent=31 // pred_check
          %p813 = pneg %p105
        $region34: #{tpu_custom_call.1} parent=31 // pred_check_branch
          %815 = sbr.rel (%p813) target = $region36
        $region35: #{tpu_custom_call.1} parent=31 // pred_region
          %s816 = smul.u32 8, %s19
        $region36: #{tpu_custom_call.1} parent=31 // pred_fallthru
          _
        // Predicated region
        $region37: #{tpu_custom_call.1} parent=31 // pred_check
          %p817 = pneg %p131
        $region38: #{tpu_custom_call.1} parent=31 // pred_check_branch
          %819 = sbr.rel (%p817) target = $region40
        $region39: #{tpu_custom_call.1} parent=31 // pred_region
          %s821 = ssub.s32 128, 128
          %822 = vsyncadd %s809, %s821
          %s823 = smul.addr %s19, 128
          %s824 = scalar_lea.hbm %s4, %s823
          %s826 = sshll.u32 %s812, 4
          %s827 = int_to_ptr.vmem [resolvable:$true] %s826
          %829 = dma.vmem_to_hbm [thread:$0]  %s827, 128, %s824, %s809
        $region40: #{tpu_custom_call.1} parent=31 // pred_fallthru
          _
      $region32: #{tpu_custom_call.1} parent=5 // pred_fallthru
        _
      %p830 = scmp.le.s32.totalorder 2, %s14
      // Predicated region
      $region41: #{tpu_custom_call.1} parent=5 // pred_check
        %p831 = pneg %p830
      $region42: #{tpu_custom_call.1} parent=5 // pred_check_branch
        %833 = sbr.rel (%p831) target = $region44
      $region43: #{tpu_custom_call.1} parent=5 // pred_region
        %s834 = ssub.s32 %s14, 2
        // Predicated region
        $region45: #{tpu_custom_call.1} parent=43 // pred_check
          %p835 = pneg %p111
        $region46: #{tpu_custom_call.1} parent=43 // pred_check_branch
          %837 = sbr.rel (%p835) target = $region48
        $region47: #{tpu_custom_call.1} parent=43 // pred_region
          %s838 = smul.u32 8, %s20
          %p839 = scmp.lt.s32.totalorder %s838, 15
          %s840 = scalar_select %p839, %s838, 15
          %s841 = smul.addr %s840, 8
          %s842 = scalar_lea.vmem %s3, %s841
        $region48: #{tpu_custom_call.1} parent=43 // pred_fallthru
          _
        // Predicated region
        $region49: #{tpu_custom_call.1} parent=43 // pred_check
          %p843 = pneg %p137
        $region50: #{tpu_custom_call.1} parent=43 // pred_check_branch
          %845 = sbr.rel (%p843) target = $region52
        $region51: #{tpu_custom_call.1} parent=43 // pred_region
          %s846 = sand.u32 %s122, 1
          %s847 = scalar_lea.sflag [#allocation3], %s846
          %s848 = sand.u32 %s122, 1
          %s849 = smul.addr %s848, 8
          %s850 = scalar_lea.vmem [#allocation2], %s849
          %851 = dma.done %s847, 128
        $region52: #{tpu_custom_call.1} parent=43 // pred_fallthru
          _
      $region44: #{tpu_custom_call.1} parent=5 // pred_fallthru
        _
    $region6: #{tpu_custom_call.1} parent=1 // loop_footer
      %s18 = sadd.s32 1, %s14
    $region7: #{tpu_custom_call.1} parent=1 // loop_footer_branch
      %13 = sbr.rel target = $region3
    $region8: #{tpu_custom_call.1} parent=1 // loop_exit
      _
    %852 = vsyncpa [#allocation3], 1
    %s853 = scalar_lea.sflag [#allocation3], 1
    %854 = vsyncpa %s853, 1

</llo_original>
